<compile_context>
chip_gen: v7x
topology: tpu7x:2x2x1
jax: 0.10.0
libtpu: 0.0.40
codegen_flags: <defaults>
</compile_context>

<pallas_src>
import jax
import jax.numpy as jnp
from jax.experimental import pallas as pl
from jax.experimental.pallas import tpu as pltpu


def _identity_kernel(x_ref, o_ref):
    # Pure pass-through: the base class defines no transformation.
    o_ref[...] = x_ref[...]


class EncoderBase:
    """JAX/Pallas mirror of the PyTorch EncoderBase (abstract encoder stub)."""

    def __init__(self, latent_dim: int):
        self.latent_dim = latent_dim

    def forward(self, x: jax.Array) -> jax.Array:
        # TODO(synk): EncoderBase.forward is abstract in PyTorch (raises
        # NotImplementedError); a concrete subclass (conv stack -> latent_dim)
        # would replace this identity body.  For that future real encoder:
        # re-derive tiling for v7x's 64 MiB VMEM and mark the batch/row grid
        # axis "parallel" (2 TensorCores), use 512+-wide lane-dense tiles with
        # a trailing "arbitrary" reduction axis + f32 VMEM accumulator on v6e,
        # and keep f32 epilogues / 128-multiple N tiles on v5e.
        n, c, h, w = x.shape
        rows = n * c          # 8   -> sublane axis (f32 tile: multiple of 8)
        cols = h * w          # 256 -> lane axis (multiple of 128, lane-dense)
        x2d = x.reshape(rows, cols)

        out2d = pl.pallas_call(
            _identity_kernel,
            out_shape=jax.ShapeDtypeStruct((rows, cols), x.dtype),
            in_specs=[pl.BlockSpec(memory_space=pltpu.MemorySpace.VMEM)],
            out_specs=pl.BlockSpec(memory_space=pltpu.MemorySpace.VMEM),
            input_output_aliases={0: 0},
        )(x2d)

        return out2d.reshape(n, c, h, w)

    __call__ = forward


if __name__ == "__main__":
    key = jax.random.PRNGKey(0)
    # Small NCHW input consistent with an image encoder: batch=2, channels=4,
    # spatial=16x16.
    x = jax.random.normal(key, (2, 4, 16, 16), dtype=jnp.float32)

    enc = EncoderBase(latent_dim=32)
    y = enc(x)
    y = jax.block_until_ready(y)

    # Sanity: the base class applies no transformation.
    assert y.shape == x.shape and y.dtype == x.dtype
    assert bool(jnp.allclose(y, x))

    print("KERNEL_OK")
</pallas_src>

<mosaic_0001>
module attributes {stable_mosaic.version = 11 : i64} {
  func.func @_identity_kernel(%arg0: memref<8x256xf32, #tpu.memory_space<vmem>>, %arg1: memref<8x256xf32, #tpu.memory_space<vmem>>) attributes {dimension_semantics = [], scalar_prefetch = 0 : i64, scratch_operands = 0 : i64, tpu.core_type = #tpu.core_type<tc>} {
    %c0 = arith.constant 0 : index
    %c0_0 = arith.constant 0 : index
    %0 = vector.load %arg0[%c0, %c0_0] : memref<8x256xf32, #tpu.memory_space<vmem>>, vector<8x256xf32>
    %c0_1 = arith.constant 0 : index
    %c0_2 = arith.constant 0 : index
    %1 = vector.load %arg1[%c0_1, %c0_2] : memref<8x256xf32, #tpu.memory_space<vmem>>, vector<8x256xf32>
    tpu.vector_store %arg1[%c0_1, %c0_2], %0 {strides = array<i32>} : memref<8x256xf32, #tpu.memory_space<vmem>>, vector<8x256xf32>,
    return
  }
}

</mosaic_0001>

<llo_original>
// kernel: tpu_custom_call.1
$region0: #{tpu_custom_call.1}
  #allocation0 [shape = 'u32[]', space=smem, size = 0x4, offset = 0x4, fixed_abs, tag = 'smem constant byte address 0x4 - core index']
  #allocation1 [shape = 'u32[144,128]{1,0:T(1,128)}', space=vmem, size = 0x12000, scoped, tag = 'internal scratch']
  %s0 = inlined_call_operand.hbm [shape: f32[8,256], index: 0, kind: input, shape index: {}, may-alias: {0,1}]
  %s1 = inlined_call_operand.hbm [shape: f32[8,256], index: 1, kind: output, shape index: {}, may-alias: {0,1}]
  %s2 = sld [smem:[#allocation0]]
  $region18: #{tpu_custom_call.1} parent=0
    _
  %s4 = ssub.s32 1, %s2
  %s5 = scalar_select 0, %s4, %s2
  $region1: #{tpu_custom_call.1} parent=0
    #allocation2 [shape = 'u8[8192]{0}', space=vmem, size = 0x2000, scoped, tag = 'input window, operand 0, single buffered']
    #allocation3 [shape = 's32[1]{0}', space=sflag, size = 0x4, scoped, tag = 'scoped memory for tpu_custom_call.1']
    #allocation4 [shape = 's32[1]{0}', space=sflag, size = 0x4, scoped, tag = 'scoped memory for tpu_custom_call.1']
    #allocation5 [shape = 'u8[8192]{0}', space=vmem, size = 0x2000, scoped, tag = 'output window, operand 0, single buffered']
    %6 = vsyncpa [#allocation3], 0
    %7 = vsyncpa [#allocation4], 0
    // Predicated region
    $region2: #{tpu_custom_call.1} parent=1 // pred_check
      _
    $region3: #{tpu_custom_call.1} parent=1 // pred_check_branch
      %9 = sbr.rel (0) target = $region5
    $region4: #{tpu_custom_call.1} parent=1 // pred_region
      %s11 = ssub.s32 256, 256
      %12 = vsyncadd [#allocation3], %s11
      %s14 = sshll.u32 [#allocation2], 4
      %s15 = int_to_ptr.vmem [resolvable:$true] %s14
      %17 = dma.hbm_to_vmem [thread:$0]  %s0, 256, %s15, [#allocation3]
    $region5: #{tpu_custom_call.1} parent=1 // pred_fallthru
      _
    // Predicated region
    $region6: #{tpu_custom_call.1} parent=1 // pred_check
      _
    $region7: #{tpu_custom_call.1} parent=1 // pred_check_branch
      %19 = sbr.rel (0) target = $region9
    $region8: #{tpu_custom_call.1} parent=1 // pred_region
      %20 = dma.done [#allocation3], 256
    $region9: #{tpu_custom_call.1} parent=1 // pred_fallthru
      _
    %v21 = vld [vmem:[#allocation2] sm:$0xff]
    %v22 = vld [vmem:[#allocation2 + $0x8] sm:$0xff]
    %23 = vst [vmem:[#allocation5] sm:$0xff] %v21
    %24 = vst [vmem:[#allocation5 + $0x8] sm:$0xff] %v22
    // Predicated region
    $region10: #{tpu_custom_call.1} parent=1 // pred_check
      _
    $region11: #{tpu_custom_call.1} parent=1 // pred_check_branch
      %26 = sbr.rel (0) target = $region13
    $region12: #{tpu_custom_call.1} parent=1 // pred_region
      %s28 = ssub.s32 256, 256
      %29 = vsyncadd [#allocation4], %s28
      %s31 = sshll.u32 [#allocation5], 4
      %s32 = int_to_ptr.vmem [resolvable:$true] %s31
      %34 = dma.vmem_to_hbm [thread:$0]  %s32, 256, %s1, [#allocation4]
    $region13: #{tpu_custom_call.1} parent=1 // pred_fallthru
      _
    // Predicated region
    $region14: #{tpu_custom_call.1} parent=1 // pred_check
      _
    $region15: #{tpu_custom_call.1} parent=1 // pred_check_branch
      %36 = sbr.rel (0) target = $region17
    $region16: #{tpu_custom_call.1} parent=1 // pred_region
      %37 = dma.done [#allocation4], 256
    $region17: #{tpu_custom_call.1} parent=1 // pred_fallthru
      _
    %38 = vsyncpa [#allocation3], 1
    %39 = vsyncpa [#allocation4], 1

</llo_original>
